<compile_context>
chip_gen: v7x
topology: tpu7x:2x2x1
jax: 0.10.0
libtpu: 0.0.40
codegen_flags: <defaults>
</compile_context>

<pallas_src>
import jax
import jax.numpy as jnp
from jax.experimental import pallas as pl
from jax.experimental.pallas import tpu as pltpu

LEAKY_SLOPE = 0.01  # torch.nn.LeakyReLU default negative_slope
LANE = 128


# ---------------------------------------------------------------------------
# Small helpers
# ---------------------------------------------------------------------------
def _round_up(x, m):
    return ((x + m - 1) // m) * m


def _cdiv(a, b):
    return (a + b - 1) // b


def _pad2(a, rows, cols):
    return jnp.pad(a, ((0, rows - a.shape[0]), (0, cols - a.shape[1])))


def _hw_config():
    """Generation-aware limits: v5e/v6e = 128 MiB VMEM / 1 TC, v7x-class = 64 MiB / 2 TCs."""
    try:
        vmem_bytes = int(pltpu.get_tpu_info().vmem_capacity_bytes)
    except Exception:
        vmem_bytes = 64 << 20  # conservative: assume v7x-class
    if vmem_bytes >= (100 << 20):
        return {"vmem_limit": 100 << 20, "vmem_budget": 88 << 20, "max_tm": 1024, "num_cores": 1}
    return {"vmem_limit": 48 << 20, "vmem_budget": 40 << 20, "max_tm": 512, "num_cores": 2}


def _pinned_spec(shape):
    """Block-invariant parameter: pinned in VMEM, single-buffered (no double-buffer waste)."""
    try:
        return pl.BlockSpec(shape, lambda i: (0, 0), pipeline_mode=pl.Buffered(1))
    except (TypeError, AttributeError):
        return pl.BlockSpec(shape, lambda i: (0, 0))


# ---------------------------------------------------------------------------
# Fused kernel (layers unrolled at trace time)
# ---------------------------------------------------------------------------
def _make_fused_kernel(layer_specs):
    """layer_specs: tuple of (is_fused_residual, d_out_padded) per residual block."""

    def kernel(*refs):
        x_ref = refs[0]
        o_ref = refs[-1]
        prm = refs[1:-1]  # interleaved (w, b) per block, then (w_out, b_out)

        fea = x_ref[...].astype(jnp.bfloat16)  # cast in-kernel: no wrapper pad/cast pass
        idx = 0
        for is_fused, do_pad in layer_specs:
            w_ref, b_ref = prm[idx], prm[idx + 1]
            idx += 2
            # Single MXU pass. For fused blocks w_ref = [W | Wres] (or [W | I]).
            z = jnp.dot(fea, w_ref[...], preferred_element_type=jnp.float32)
            if is_fused:
                h = z[:, :do_pad] + b_ref[...]     # fc branch (f32)
                res = z[:, do_pad:]                # residual branch (f32)
            else:
                h = z + b_ref[...]
                res = fea.astype(jnp.float32)      # identity residual (widths match)
            h = jnp.where(h >= 0, h, LEAKY_SLOPE * h)   # LeakyReLU in f32
            fea = (h + res).astype(jnp.bfloat16)        # bf16 for the next MXU pass

        # final fc_out
        w_ref, b_ref = prm[idx], prm[idx + 1]
        out = jnp.dot(fea, w_ref[...], preferred_element_type=jnp.float32) + b_ref[...]
        o_ref[...] = out.astype(o_ref.dtype)   # bf16 lane-dense slab

    return kernel


# ---------------------------------------------------------------------------
# Parameter construction (deterministic, synthetic) + packing for the kernel
# ---------------------------------------------------------------------------
def init_params(key, input_dim, output_dim, hidden_layer_dims):
    dims = [input_dim] + list(hidden_layer_dims)
    params = {"fcs": [], "res_fcs": [], "fc_out": None}
    for i in range(len(dims) - 1):
        key, kw, kb, kr = jax.random.split(key, 4)
        w = jax.random.normal(kw, (dims[i], dims[i + 1]), jnp.float32) * 0.1
        b = jax.random.normal(kb, (1, dims[i + 1]), jnp.float32) * 0.1
        params["fcs"].append((w, b))
        if dims[i] != dims[i + 1]:
            wr = jax.random.normal(kr, (dims[i], dims[i + 1]), jnp.float32) * 0.1
            params["res_fcs"].append(wr)
        else:
            params["res_fcs"].append(None)  # nn.Identity
    key, kw, kb = jax.random.split(key, 3)
    w_out = jax.random.normal(kw, (dims[-1], output_dim), jnp.float32) * 0.1
    b_out = jax.random.normal(kb, (1, output_dim), jnp.float32) * 0.1
    params["fc_out"] = (w_out, b_out)
    return params


def pack_params(params, input_dim, output_dim, hidden_layer_dims):
    """Pad output dims to multiples of 128, fuse [W|Wres] (or [W|I]), cast weights to bf16.

    The first layer keeps its true (unpadded) input width so the raw f32 activation tensor
    can feed the kernel directly."""
    dims = [input_dim] + list(hidden_layer_dims)
    packed, layer_specs = [], []
    in_width = input_dim  # activations enter the kernel unpadded
    for i, ((w, b), w_res) in enumerate(zip(params["fcs"], params["res_fcs"])):
        do_pad = _round_up(dims[i + 1], LANE)
        w_pad = _pad2(w, in_width, do_pad)
        b_pad = _pad2(b, 1, do_pad)
        if w_res is not None:
            # Projection residual: fuse [W | Wres] into a single MXU pass.
            w_comb = jnp.concatenate([w_pad, _pad2(w_res, in_width, do_pad)], axis=1)
            layer_specs.append((True, do_pad))
        elif in_width != do_pad:
            # Identity residual whose width changes under lane padding (first block with an
            # unpadded input): fuse an explicit zero-padded identity so the residual comes out
            # of the same MXU pass ([W | I]) -- exact in bf16 (x * 1.0 + 0).
            eye = jnp.eye(in_width, do_pad, dtype=jnp.float32)
            w_comb = jnp.concatenate([w_pad, eye], axis=1)
            layer_specs.append((True, do_pad))
        else:
            w_comb = w_pad
            layer_specs.append((False, do_pad))
        packed.append((w_comb.astype(jnp.bfloat16), b_pad.astype(jnp.float32)))
        in_width = do_pad

    w_out, b_out = params["fc_out"]
    dout_pad = _round_up(output_dim, LANE)
    packed.append((
        _pad2(w_out, in_width, dout_pad).astype(jnp.bfloat16),
        _pad2(b_out, 1, dout_pad).astype(jnp.float32),
    ))
    meta = {
        "layer_specs": tuple(layer_specs),
        "input_dim": input_dim,
        "output_dim": output_dim,
        "dout_pad": dout_pad,
    }
    return {"packed": packed, "meta": meta}


# ---------------------------------------------------------------------------
# Forward pass wrapper (single fused pallas_call, batch grid)
# ---------------------------------------------------------------------------
def residual_network_forward(packed_params, fea, *, out_dtype=jnp.float32):
    meta = packed_params["meta"]
    packed = packed_params["packed"]
    n, d0 = fea.shape
    assert d0 == meta["input_dim"], "feature width must match the packed parameters"
    dout_pad = meta["dout_pad"]
    cfg = _hw_config()

    # Resident (single-buffered) parameter footprint + widest live f32 temporary.
    weight_bytes = sum(int(w.size) * w.dtype.itemsize + int(b.size) * b.dtype.itemsize
                       for w, b in packed)
    max_cols = max(max(int(w.shape[1]) for w, _ in packed), dout_pad)
    in_itemsize = fea.dtype.itemsize

    def vmem_est(tm):
        x_bufs = 2 * tm * d0 * in_itemsize        # double-buffered input tiles
        o_bufs = 2 * tm * dout_pad * 2            # double-buffered bf16 output tiles
        temps = 3 * tm * max_cols * 4             # live f32 intermediates (z / h / res)
        return weight_bytes + x_bufs + o_bufs + temps

    # Batch tiling: 16-row aligned (bf16 packing), balanced tiles, >= 2 grid steps per
    # TensorCore when the batch permits (megacore on v7x + DMA overlap), VMEM-budgeted.
    n16 = _round_up(max(n, 1), 16)
    groups = n16 // 16
    min_tiles = min(2 * cfg["num_cores"], groups)
    num_tiles = max(_cdiv(n16, cfg["max_tm"]), min_tiles, 1)
    tm = _round_up(_cdiv(n16, num_tiles), 16)
    while tm > 16 and vmem_est(tm) > cfg["vmem_budget"]:
        tm -= 16
    n_pad = _round_up(n16, tm)
    grid = (n_pad // tm,)

    # Only pad rows when needed (feature dim is never padded host-side; cast happens in-kernel).
    x = fea if n_pad == n else jnp.pad(fea, ((0, n_pad - n), (0, 0)))

    operands = [x]
    in_specs = [pl.BlockSpec((tm, d0), lambda i: (i, 0))]
    for w, b in packed:
        operands += [w, b]
        in_specs += [_pinned_spec(w.shape), _pinned_spec(b.shape)]

    flops = 2 * n_pad * sum(int(w.shape[0]) * int(w.shape[1]) for w, _ in packed)
    bytes_accessed = int(x.size) * in_itemsize + n_pad * dout_pad * 2 + weight_bytes

    out_padded = pl.pallas_call(
        _make_fused_kernel(meta["layer_specs"]),
        out_shape=jax.ShapeDtypeStruct((n_pad, dout_pad), jnp.bfloat16),
        grid_spec=pltpu.PrefetchScalarGridSpec(
            num_scalar_prefetch=0,
            grid=grid,
            in_specs=in_specs,
            out_specs=pl.BlockSpec((tm, dout_pad), lambda i: (i, 0)),
        ),
        compiler_params=pltpu.CompilerParams(
            dimension_semantics=("parallel",),        # megacore split over batch tiles
            vmem_limit_bytes=cfg["vmem_limit"],
        ),
        cost_estimate=pl.CostEstimate(flops=flops, transcendentals=0,
                                      bytes_accessed=bytes_accessed),
    )(*operands)

    out = out_padded[:n, :meta["output_dim"]]
    return out.astype(out_dtype)


# Pure-JAX f32 reference for validation
def residual_network_ref(params, fea):
    for (w, b), w_res in zip(params["fcs"], params["res_fcs"]):
        h = fea @ w + b
        h = jnp.where(h >= 0, h, LEAKY_SLOPE * h)
        res = fea if w_res is None else fea @ w_res
        fea = h + res
    w_out, b_out = params["fc_out"]
    return fea @ w_out + b_out


if __name__ == "__main__":
    key = jax.random.PRNGKey(0)
    key, kx = jax.random.split(key)

    # Small shapes consistent with the module: fea is (batch, input_dim)
    batch, input_dim, output_dim = 8, 32, 8
    hidden_layer_dims = [32, 64]  # block 0: Identity residual; block 1: projection residual

    params = init_params(key, input_dim, output_dim, hidden_layer_dims)
    packed = pack_params(params, input_dim, output_dim, hidden_layer_dims)
    fea = jax.random.normal(kx, (batch, input_dim), jnp.float32)

    out = residual_network_forward(packed, fea)
    out = jax.block_until_ready(out)

    ref = residual_network_ref(params, fea)
    assert out.shape == (batch, output_dim)
    # bf16 matmul operands + bf16 output slab (f32 accumulation) -> looser tolerance than f32.
    max_diff = float(jnp.max(jnp.abs(out - ref)))
    assert jnp.allclose(out, ref, atol=5e-2, rtol=5e-2), f"mismatch vs reference (max diff {max_diff})"

    print("KERNEL_OK")
</pallas_src>

<mosaic_0001>
module attributes {stable_mosaic.version = 11 : i64} {
  func.func @kernel(%arg0: i32, %arg1: memref<16x32xf32, #tpu.memory_space<vmem>>, %arg2: memref<32x256xbf16, #tpu.memory_space<vmem>>, %arg3: memref<1x128xf32, #tpu.memory_space<vmem>>, %arg4: memref<128x256xbf16, #tpu.memory_space<vmem>>, %arg5: memref<1x128xf32, #tpu.memory_space<vmem>>, %arg6: memref<128x128xbf16, #tpu.memory_space<vmem>>, %arg7: memref<1x128xf32, #tpu.memory_space<vmem>>, %arg8: memref<16x128xbf16, #tpu.memory_space<vmem>>) attributes {dimension_semantics = [#tpu.dimension_semantics<parallel>], iteration_bounds = array<i64: 1>, scalar_prefetch = 0 : i64, scratch_operands = 0 : i64, tpu.core_type = #tpu.core_type<tc>, window_params = [{transform_indices = @transform_0, window_bounds = array<i64: 16, 32>}, {pipeline_mode = #tpu.pipeline_mode<synchronous>, transform_indices = @transform_1, window_bounds = array<i64: 32, 256>}, {pipeline_mode = #tpu.pipeline_mode<synchronous>, transform_indices = @transform_2, window_bounds = array<i64: 1, 128>}, {pipeline_mode = #tpu.pipeline_mode<synchronous>, transform_indices = @transform_3, window_bounds = array<i64: 128, 256>}, {pipeline_mode = #tpu.pipeline_mode<synchronous>, transform_indices = @transform_4, window_bounds = array<i64: 1, 128>}, {pipeline_mode = #tpu.pipeline_mode<synchronous>, transform_indices = @transform_5, window_bounds = array<i64: 128, 128>}, {pipeline_mode = #tpu.pipeline_mode<synchronous>, transform_indices = @transform_6, window_bounds = array<i64: 1, 128>}, {transform_indices = @transform_7, window_bounds = array<i64: 16, 128>}]} {
    %c0 = arith.constant 0 : index
    %c0_0 = arith.constant 0 : index
    %0 = vector.load %arg1[%c0, %c0_0] : memref<16x32xf32, #tpu.memory_space<vmem>>, vector<16x32xf32>
    %1 = arith.truncf %0 : vector<16x32xf32> to vector<16x32xbf16>
    %c0_1 = arith.constant 0 : index
    %c0_2 = arith.constant 0 : index
    %2 = vector.load %arg2[%c0_1, %c0_2] : memref<32x256xbf16, #tpu.memory_space<vmem>>, vector<32x256xbf16>
    %cst = arith.constant dense<0.000000e+00> : vector<16x256xf32>
    %3 = tpu.matmul %1, %2, %cst {dimension_numbers = #tpu.dot_dimension_numbers<[1], [0], [0], [1], [0, 0, 1, 1], [], []>} : vector<16x32xbf16>, vector<32x256xbf16>, vector<16x256xf32> -> vector<16x256xf32>
    %4 = vector.extract_strided_slice %3 {offsets = [0, 0], sizes = [16, 128], strides = [1, 1]} : vector<16x256xf32> to vector<16x128xf32>
    %c0_3 = arith.constant 0 : index
    %c0_4 = arith.constant 0 : index
    %5 = vector.load %arg3[%c0_3, %c0_4] : memref<1x128xf32, #tpu.memory_space<vmem>>, vector<1x128xf32>
    %6 = vector.broadcast %5 : vector<1x128xf32> to vector<16x128xf32>
    %7 = arith.addf %4, %6 : vector<16x128xf32>
    %8 = vector.extract_strided_slice %3 {offsets = [0, 128], sizes = [16, 128], strides = [1, 1]} : vector<16x256xf32> to vector<16x128xf32>
    %cst_5 = arith.constant 0.000000e+00 : f32
    %9 = vector.broadcast %cst_5 : f32 to vector<16x128xf32>
    %10 = arith.cmpf oge, %7, %9 : vector<16x128xf32>
    %cst_6 = arith.constant 0.00999999977 : f32
    %11 = vector.broadcast %cst_6 : f32 to vector<16x128xf32>
    %12 = arith.mulf %11, %7 : vector<16x128xf32>
    %13 = arith.select %10, %7, %12 : vector<16x128xi1>, vector<16x128xf32>
    %14 = arith.addf %13, %8 : vector<16x128xf32>
    %15 = arith.truncf %14 : vector<16x128xf32> to vector<16x128xbf16>
    %c0_7 = arith.constant 0 : index
    %c0_8 = arith.constant 0 : index
    %16 = vector.load %arg4[%c0_7, %c0_8] : memref<128x256xbf16, #tpu.memory_space<vmem>>, vector<128x256xbf16>
    %cst_9 = arith.constant dense<0.000000e+00> : vector<16x256xf32>
    %17 = tpu.matmul %15, %16, %cst_9 {dimension_numbers = #tpu.dot_dimension_numbers<[1], [0], [0], [1], [0, 0, 1, 1], [], []>} : vector<16x128xbf16>, vector<128x256xbf16>, vector<16x256xf32> -> vector<16x256xf32>
    %18 = vector.extract_strided_slice %17 {offsets = [0, 0], sizes = [16, 128], strides = [1, 1]} : vector<16x256xf32> to vector<16x128xf32>
    %c0_10 = arith.constant 0 : index
    %c0_11 = arith.constant 0 : index
    %19 = vector.load %arg5[%c0_10, %c0_11] : memref<1x128xf32, #tpu.memory_space<vmem>>, vector<1x128xf32>
    %20 = vector.broadcast %19 : vector<1x128xf32> to vector<16x128xf32>
    %21 = arith.addf %18, %20 : vector<16x128xf32>
    %22 = vector.extract_strided_slice %17 {offsets = [0, 128], sizes = [16, 128], strides = [1, 1]} : vector<16x256xf32> to vector<16x128xf32>
    %cst_12 = arith.constant 0.000000e+00 : f32
    %23 = vector.broadcast %cst_12 : f32 to vector<16x128xf32>
    %24 = arith.cmpf oge, %21, %23 : vector<16x128xf32>
    %cst_13 = arith.constant 0.00999999977 : f32
    %25 = vector.broadcast %cst_13 : f32 to vector<16x128xf32>
    %26 = arith.mulf %25, %21 : vector<16x128xf32>
    %27 = arith.select %24, %21, %26 : vector<16x128xi1>, vector<16x128xf32>
    %28 = arith.addf %27, %22 : vector<16x128xf32>
    %29 = arith.truncf %28 : vector<16x128xf32> to vector<16x128xbf16>
    %c0_14 = arith.constant 0 : index
    %c0_15 = arith.constant 0 : index
    %30 = vector.load %arg6[%c0_14, %c0_15] : memref<128x128xbf16, #tpu.memory_space<vmem>>, vector<128x128xbf16>
    %cst_16 = arith.constant dense<0.000000e+00> : vector<16x128xf32>
    %31 = tpu.matmul %29, %30, %cst_16 {dimension_numbers = #tpu.dot_dimension_numbers<[1], [0], [0], [1], [0, 0, 1, 1], [], []>} : vector<16x128xbf16>, vector<128x128xbf16>, vector<16x128xf32> -> vector<16x128xf32>
    %c0_17 = arith.constant 0 : index
    %c0_18 = arith.constant 0 : index
    %32 = vector.load %arg7[%c0_17, %c0_18] : memref<1x128xf32, #tpu.memory_space<vmem>>, vector<1x128xf32>
    %33 = vector.broadcast %32 : vector<1x128xf32> to vector<16x128xf32>
    %34 = arith.addf %31, %33 : vector<16x128xf32>
    %35 = arith.truncf %34 : vector<16x128xf32> to vector<16x128xbf16>
    %c0_19 = arith.constant 0 : index
    %c0_20 = arith.constant 0 : index
    %36 = vector.load %arg8[%c0_19, %c0_20] : memref<16x128xbf16, #tpu.memory_space<vmem>>, vector<16x128xbf16>
    tpu.vector_store %arg8[%c0_19, %c0_20], %35 {strides = array<i32>} : memref<16x128xbf16, #tpu.memory_space<vmem>>, vector<16x128xbf16>,
    return
  }
  func.func @transform_0(%arg0: i32) -> (i32, i32) {
    %c0_i32 = arith.constant 0 : i32
    %c0_i32_0 = arith.constant 0 : i32
    return %arg0, %c0_i32 : i32, i32
  }
  func.func @transform_1(%arg0: i32) -> (i32, i32) {
    %c0_i32 = arith.constant 0 : i32
    %c0_i32_0 = arith.constant 0 : i32
    %c0_i32_1 = arith.constant 0 : i32
    return %c0_i32, %c0_i32_0 : i32, i32
  }
  func.func @transform_2(%arg0: i32) -> (i32, i32) {
    %c0_i32 = arith.constant 0 : i32
    %c0_i32_0 = arith.constant 0 : i32
    %c0_i32_1 = arith.constant 0 : i32
    return %c0_i32, %c0_i32_0 : i32, i32
  }
  func.func @transform_3(%arg0: i32) -> (i32, i32) {
    %c0_i32 = arith.constant 0 : i32
    %c0_i32_0 = arith.constant 0 : i32
    %c0_i32_1 = arith.constant 0 : i32
    return %c0_i32, %c0_i32_0 : i32, i32
  }
  func.func @transform_4(%arg0: i32) -> (i32, i32) {
    %c0_i32 = arith.constant 0 : i32
    %c0_i32_0 = arith.constant 0 : i32
    %c0_i32_1 = arith.constant 0 : i32
    return %c0_i32, %c0_i32_0 : i32, i32
  }
  func.func @transform_5(%arg0: i32) -> (i32, i32) {
    %c0_i32 = arith.constant 0 : i32
    %c0_i32_0 = arith.constant 0 : i32
    %c0_i32_1 = arith.constant 0 : i32
    return %c0_i32, %c0_i32_0 : i32, i32
  }
  func.func @transform_6(%arg0: i32) -> (i32, i32) {
    %c0_i32 = arith.constant 0 : i32
    %c0_i32_0 = arith.constant 0 : i32
    %c0_i32_1 = arith.constant 0 : i32
    return %c0_i32, %c0_i32_0 : i32, i32
  }
  func.func @transform_7(%arg0: i32) -> (i32, i32) {
    %c0_i32 = arith.constant 0 : i32
    %c0_i32_0 = arith.constant 0 : i32
    return %arg0, %c0_i32 : i32, i32
  }
}

</mosaic_0001>

<llo_original>
// kernel: tpu_custom_call.1
$region0: #{tpu_custom_call.1}
  #allocation0 [shape = 'u32[]', space=smem, size = 0x4, offset = 0x4, fixed_abs, tag = 'smem constant byte address 0x4 - core index']
  #allocation1 [shape = 'u32[144,128]{1,0:T(1,128)}', space=vmem, size = 0x12000, scoped, tag = 'internal scratch']
  %s0 = inlined_call_operand.hbm [shape: f32[16,32], index: 0, kind: input, shape index: {}]
  %s1 = inlined_call_operand.hbm [shape: bf16[32,256], index: 1, kind: input, shape index: {}]
  %s2 = inlined_call_operand.vmem [shape: f32[1,128], index: 2, kind: input, shape index: {}]
  %s3 = inlined_call_operand.hbm [shape: bf16[128,256], index: 3, kind: input, shape index: {}]
  %s4 = inlined_call_operand.vmem [shape: f32[1,128], index: 4, kind: input, shape index: {}]
  %s5 = inlined_call_operand.hbm [shape: bf16[128,128], index: 5, kind: input, shape index: {}]
  %s6 = inlined_call_operand.vmem [shape: f32[1,128], index: 6, kind: input, shape index: {}]
  %s7 = inlined_call_operand.hbm [shape: bf16[16,128], index: 7, kind: output, shape index: {}]
  %s8 = sld [smem:[#allocation0]]
  $region54: #{tpu_custom_call.1} parent=0
    _
  %s10 = ssub.s32 1, %s8
  %s11 = scalar_select 0, %s10, %s8
  $region1: #{tpu_custom_call.1} parent=0
    #allocation2 [shape = 'u8[8192]{0}', space=vmem, size = 0x2000, scoped, tag = 'input window, operand 0, single buffered']
    #allocation3 [shape = 's32[1]{0}', space=sflag, size = 0x4, scoped, tag = 'scoped memory for tpu_custom_call.1']
    #allocation4 [shape = 's32[1]{0}', space=sflag, size = 0x4, scoped, tag = 'scoped memory for tpu_custom_call.1']
    #allocation5 [shape = 'u8[16384]{0}', space=vmem, size = 0x4000, scoped, tag = 'input window, operand 1, single buffered']
    #allocation6 [shape = 's32[1]{0}', space=sflag, size = 0x4, scoped, tag = 'scoped memory for tpu_custom_call.1']
    #allocation7 [shape = 'u8[65536]{0}', space=vmem, size = 0x10000, scoped, tag = 'input window, operand 3, single buffered']
    #allocation8 [shape = 'u8[32768]{0}', space=vmem, size = 0x8000, scoped, tag = 'input window, operand 5, single buffered']
    #allocation9 [shape = 's32[1]{0}', space=sflag, size = 0x4, scoped, tag = 'scoped memory for tpu_custom_call.1']
    #allocation10 [shape = 'u8[4096]{0}', space=vmem, size = 0x1000, scoped, tag = 'output window, operand 0, single buffered']
    %12 = vsyncpa [#allocation3], 0
    %13 = vsyncpa [#allocation6], 0
    %14 = vsyncpa [#allocation9], 0
    %15 = vsyncpa [#allocation4], 0
    // Predicated region
    $region2: #{tpu_custom_call.1} parent=1 // pred_check
      _
    $region3: #{tpu_custom_call.1} parent=1 // pred_check_branch
      %17 = sbr.rel (0) target = $region5
    $region4: #{tpu_custom_call.1} parent=1 // pred_region
      %s19 = ssub.s32 256, 256
      %20 = vsyncadd [#allocation3], %s19
      %s21 = sshll.u32 [#allocation2], 4
      %s22 = int_to_ptr.vmem [resolvable:$true] %s21
      %27 = dma.hbm_to_vmem [thread:$0]  %s0, 256, %s22, [#allocation3], 128, 128, 8
    $region5: #{tpu_custom_call.1} parent=1 // pred_fallthru
      _
    // Predicated region
    $region6: #{tpu_custom_call.1} parent=1 // pred_check
      _
    $region7: #{tpu_custom_call.1} parent=1 // pred_check_branch
      %29 = sbr.rel (0) target = $region9
    $region8: #{tpu_custom_call.1} parent=1 // pred_region
      %s31 = ssub.s32 512, 512
      %32 = vsyncadd [#allocation6], %s31
      %s33 = sshll.u32 [#allocation5], 4
      %s34 = int_to_ptr.vmem [resolvable:$true] %s33
      %39 = dma.hbm_to_vmem [thread:$0]  %s1, 512, %s34, [#allocation6], 128, 128, 8
    $region9: #{tpu_custom_call.1} parent=1 // pred_fallthru
      _
    // Predicated region
    $region10: #{tpu_custom_call.1} parent=1 // pred_check
      _
    $region11: #{tpu_custom_call.1} parent=1 // pred_check_branch
      %41 = sbr.rel (0) target = $region13
    $region12: #{tpu_custom_call.1} parent=1 // pred_region
      _
    $region13: #{tpu_custom_call.1} parent=1 // pred_fallthru
      _
    // Predicated region
    $region14: #{tpu_custom_call.1} parent=1 // pred_check
      _
    $region15: #{tpu_custom_call.1} parent=1 // pred_check_branch
      %43 = sbr.rel (0) target = $region17
    $region16: #{tpu_custom_call.1} parent=1 // pred_region
      %s45 = ssub.s32 2048, 2048
      %46 = vsyncadd [#allocation6], %s45
      %s47 = sshll.u32 [#allocation7], 4
      %s48 = int_to_ptr.vmem [resolvable:$true] %s47
      %53 = dma.hbm_to_vmem [thread:$0]  %s3, 2048, %s48, [#allocation6], 128, 128, 8
    $region17: #{tpu_custom_call.1} parent=1 // pred_fallthru
      _
    // Predicated region
    $region18: #{tpu_custom_call.1} parent=1 // pred_check
      _
    $region19: #{tpu_custom_call.1} parent=1 // pred_check_branch
      %55 = sbr.rel (0) target = $region21
    $region20: #{tpu_custom_call.1} parent=1 // pred_region
      _
    $region21: #{tpu_custom_call.1} parent=1 // pred_fallthru
      _
    // Predicated region
    $region22: #{tpu_custom_call.1} parent=1 // pred_check
      _
    $region23: #{tpu_custom_call.1} parent=1 // pred_check_branch
      %57 = sbr.rel (0) target = $region25
    $region24: #{tpu_custom_call.1} parent=1 // pred_region
      %s59 = ssub.s32 1024, 1024
      %60 = vsyncadd [#allocation9], %s59
      %s61 = sshll.u32 [#allocation8], 4
      %s62 = int_to_ptr.vmem [resolvable:$true] %s61
      %67 = dma.hbm_to_vmem [thread:$0]  %s5, 1024, %s62, [#allocation9], 64, 64, 4
    $region25: #{tpu_custom_call.1} parent=1 // pred_fallthru
      _
    // Predicated region
    $region26: #{tpu_custom_call.1} parent=1 // pred_check
      _
    $region27: #{tpu_custom_call.1} parent=1 // pred_check_branch
      %69 = sbr.rel (0) target = $region29
    $region28: #{tpu_custom_call.1} parent=1 // pred_region
      _
    $region29: #{tpu_custom_call.1} parent=1 // pred_fallthru
      _
    // Predicated region
    $region30: #{tpu_custom_call.1} parent=1 // pred_check
      _
    $region31: #{tpu_custom_call.1} parent=1 // pred_check_branch
      %71 = sbr.rel (0) target = $region33
    $region32: #{tpu_custom_call.1} parent=1 // pred_region
      %72 = dma.done [#allocation3], 256
    $region33: #{tpu_custom_call.1} parent=1 // pred_fallthru
      _
    // Predicated region
    $region34: #{tpu_custom_call.1} parent=1 // pred_check
      _
    $region35: #{tpu_custom_call.1} parent=1 // pred_check_branch
      %74 = sbr.rel (0) target = $region37
    $region36: #{tpu_custom_call.1} parent=1 // pred_region
      %75 = dma.done [#allocation6], 512
    $region37: #{tpu_custom_call.1} parent=1 // pred_fallthru
      _
    // Predicated region
    $region38: #{tpu_custom_call.1} parent=1 // pred_check
      _
    $region39: #{tpu_custom_call.1} parent=1 // pred_check_branch
      %77 = sbr.rel (0) target = $region41
    $region40: #{tpu_custom_call.1} parent=1 // pred_region
      %78 = dma.done [#allocation6], 2048
    $region41: #{tpu_custom_call.1} parent=1 // pred_fallthru
      _
    // Predicated region
    $region42: #{tpu_custom_call.1} parent=1 // pred_check
      _
    $region43: #{tpu_custom_call.1} parent=1 // pred_check_branch
      %80 = sbr.rel (0) target = $region45
    $region44: #{tpu_custom_call.1} parent=1 // pred_region
      %81 = dma.done [#allocation9], 1024
    $region45: #{tpu_custom_call.1} parent=1 // pred_fallthru
      _
    %v83 = vld [vmem:[#allocation2] sm:$0xff]
    %v84 = vld [vmem:[#allocation2 + $0x8] sm:$0xff]
    %v85 = vpack.c.bf16 %v84, %v83
    %v86 = vld [vmem:[#allocation5] sm:$0xff]
    %v87 = vld [vmem:[#allocation5 + $0x8] sm:$0xff]
    %v88 = vld [vmem:[#allocation5 + $0x10] sm:$0xff]
    %v89 = vld [vmem:[#allocation5 + $0x18] sm:$0xff]
    %v94 = vunpack.c.l.b16 %v86
    %v95 = vunpack.c.h.b16 %v86
    %v96 = vunpack.c.l.b16 %v87
    %v97 = vunpack.c.h.b16 %v87
    %v98 = vunpack.c.l.b16 %v88
    %v99 = vunpack.c.h.b16 %v88
    %v100 = vunpack.c.l.b16 %v89
    %v101 = vunpack.c.h.b16 %v89
    %v102 = vpack.c.b16 %v96, %v94
    %v103 = vpack.c.b16 %v97, %v95
    %v104 = vpack.c.b16 %v100, %v98
    %v105 = vpack.c.b16 %v101, %v99
    %vm110 = vcmask 261120
    %v112 = vsel %vm110, %v85, 0
    %114 = vmatprep.subr.bf16.mxu0 %v103
    %115 = vmatpush1.bf16.msra.mxu0 %v102
    %116 = vmatprep.subr.bf16.mxu0 %v105
    %117 = vmatpush1.bf16.msra.mxu0 %v104
    %118 = vmatprep.subr.bf16.mxu0 0
    %119 = vmatpush1.bf16.msra.mxu0 0
    %120 = vmatprep.subr.bf16.mxu0 0
    %121 = vmatpush1.bf16.msra.mxu0 0
    %122 = vmatprep.subr.bf16.mxu0 0
    %123 = vmatpush1.bf16.msra.mxu0 0
    %124 = vmatprep.subr.bf16.mxu0 0
    %125 = vmatpush1.bf16.msra.mxu0 0
    %126 = vmatprep.subr.bf16.mxu0 0
    %127 = vmatpush1.bf16.msra.mxu0 0
    %128 = vmatprep.subr.bf16.mxu0 0
    %129 = vmatpush1.bf16.msra.mxu0 0
    %130 = vmatprep.subr.bf16.mxu0 0
    %131 = vmatpush1.bf16.msra.mxu0 0
    %132 = vmatprep.subr.bf16.mxu0 0
    %133 = vmatpush1.bf16.msra.mxu0 0
    %134 = vmatprep.subr.bf16.mxu0 0
    %135 = vmatpush1.bf16.msra.mxu0 0
    %136 = vmatprep.subr.bf16.mxu0 0
    %137 = vmatpush1.bf16.msra.mxu0 0
    %138 = vmatprep.subr.bf16.mxu0 0
    %139 = vmatpush1.bf16.msra.mxu0 0
    %140 = vmatprep.subr.bf16.mxu0 0
    %141 = vmatpush1.bf16.msra.mxu0 0
    %142 = vmatprep.subr.bf16.mxu0 0
    %143 = vmatpush1.bf16.msra.mxu0 0
    %144 = vmatprep.subr.bf16.mxu0 0
    %145 = vmatpush1.bf16.msra.mxu0 0
    %146 = vmatprep.mubr.bf16.mxu0 0
    %147 = vmatmul.mubr.bf16.gmra.mrb[0].mxu0 %v112
    %v148 = vpop.f32.mrb[0].mxu0
    %v149 = vadd.f32 0.0, %v148
    %v150 = vpop.f32.mrb[0].mxu0
    %v151 = vadd.f32 0.0, %v150
    %v152 = vpop.f32.mrb[0].mxu0
    %v153 = vadd.f32 0.0, %v152
    %v154 = vpop.f32.mrb[0].mxu0
    %v155 = vadd.f32 0.0, %v154
    %156 = vdwg.mxu0
    %v157 = vld [vmem:[%s2] sm:$0x1]
    %v159 = vlaneseq
    %v160 = vshrl.u32 %v159, 7
    %v161 = vsub.s32 0, %v160
    %v162 = vrot.slane %v157, %v161
    %v164 = vadd.f32 %v149, %v162
    %v165 = vadd.f32 %v153, %v162
    %vm166 = vcmp.ge.f32.partialorder %v164, 0.0
    %vm167 = vcmp.ge.f32.partialorder %v165, 0.0
    %v168 = vmul.f32 %v164, 0.01
    %v169 = vmul.f32 %v165, 0.01
    %v170 = vsel %vm166, %v164, %v168
    %v171 = vsel %vm167, %v165, %v169
    %v172 = vadd.f32 %v170, %v151
    %v173 = vadd.f32 %v171, %v155
    %v174 = vpack.c.bf16 %v173, %v172
    %v175 = vld [vmem:[#allocation7] sm:$0xff]
    %v176 = vld [vmem:[#allocation7 + $0x8] sm:$0xff]
    %v177 = vld [vmem:[#allocation7 + $0x10] sm:$0xff]
    %v178 = vld [vmem:[#allocation7 + $0x18] sm:$0xff]
    %v179 = vld [vmem:[#allocation7 + $0x20] sm:$0xff]
    %v180 = vld [vmem:[#allocation7 + $0x28] sm:$0xff]
    %v181 = vld [vmem:[#allocation7 + $0x30] sm:$0xff]
    %v182 = vld [vmem:[#allocation7 + $0x38] sm:$0xff]
    %v183 = vld [vmem:[#allocation7 + $0x40] sm:$0xff]
    %v184 = vld [vmem:[#allocation7 + $0x48] sm:$0xff]
    %v185 = vld [vmem:[#allocation7 + $0x50] sm:$0xff]
    %v186 = vld [vmem:[#allocation7 + $0x58] sm:$0xff]
    %v187 = vld [vmem:[#allocation7 + $0x60] sm:$0xff]
    %v188 = vld [vmem:[#allocation7 + $0x68] sm:$0xff]
    %v189 = vld [vmem:[#allocation7 + $0x70] sm:$0xff]
    %v190 = vld [vmem:[#allocation7 + $0x78] sm:$0xff]
    %v207 = vunpack.c.l.b16 %v175
    %v208 = vunpack.c.h.b16 %v175
    %v209 = vunpack.c.l.b16 %v176
    %v210 = vunpack.c.h.b16 %v176
    %v211 = vunpack.c.l.b16 %v177
    %v212 = vunpack.c.h.b16 %v177
    %v213 = vunpack.c.l.b16 %v178
    %v214 = vunpack.c.h.b16 %v178
    %v215 = vunpack.c.l.b16 %v179
    %v216 = vunpack.c.h.b16 %v179
    %v217 = vunpack.c.l.b16 %v180
    %v218 = vunpack.c.h.b16 %v180
    %v219 = vunpack.c.l.b16 %v181
    %v220 = vunpack.c.h.b16 %v181
    %v221 = vunpack.c.l.b16 %v182
    %v222 = vunpack.c.h.b16 %v182
    %v223 = vunpack.c.l.b16 %v183
    %v224 = vunpack.c.h.b16 %v183
    %v225 = vunpack.c.l.b16 %v184
    %v226 = vunpack.c.h.b16 %v184
    %v227 = vunpack.c.l.b16 %v185
    %v228 = vunpack.c.h.b16 %v185
    %v229 = vunpack.c.l.b16 %v186
    %v230 = vunpack.c.h.b16 %v186
    %v231 = vunpack.c.l.b16 %v187
    %v232 = vunpack.c.h.b16 %v187
    %v233 = vunpack.c.l.b16 %v188
    %v234 = vunpack.c.h.b16 %v188
    %v235 = vunpack.c.l.b16 %v189
    %v236 = vunpack.c.h.b16 %v189
    %v237 = vunpack.c.l.b16 %v190
    %v238 = vunpack.c.h.b16 %v190
    %v239 = vpack.c.b16 %v209, %v207
    %v240 = vpack.c.b16 %v210, %v208
    %v241 = vpack.c.b16 %v213, %v211
    %v242 = vpack.c.b16 %v214, %v212
    %v243 = vpack.c.b16 %v217, %v215
    %v244 = vpack.c.b16 %v218, %v216
    %v245 = vpack.c.b16 %v221, %v219
    %v246 = vpack.c.b16 %v222, %v220
    %v247 = vpack.c.b16 %v225, %v223
    %v248 = vpack.c.b16 %v226, %v224
    %v249 = vpack.c.b16 %v229, %v227
    %v250 = vpack.c.b16 %v230, %v228
    %v251 = vpack.c.b16 %v233, %v231
    %v252 = vpack.c.b16 %v234, %v232
    %v253 = vpack.c.b16 %v237, %v235
    %v254 = vpack.c.b16 %v238, %v236
    %271 = vmatprep.subr.bf16.mxu0 %v240
    %272 = vmatpush1.bf16.msra.mxu0 %v239
    %273 = vmatprep.subr.bf16.mxu0 %v242
    %274 = vmatpush1.bf16.msra.mxu0 %v241
    %275 = vmatprep.subr.bf16.mxu0 %v244
    %276 = vmatpush1.bf16.msra.mxu0 %v243
    %277 = vmatprep.subr.bf16.mxu0 %v246
    %278 = vmatpush1.bf16.msra.mxu0 %v245
    %279 = vmatprep.subr.bf16.mxu0 %v248
    %280 = vmatpush1.bf16.msra.mxu0 %v247
    %281 = vmatprep.subr.bf16.mxu0 %v250
    %282 = vmatpush1.bf16.msra.mxu0 %v249
    %283 = vmatprep.subr.bf16.mxu0 %v252
    %284 = vmatpush1.bf16.msra.mxu0 %v251
    %285 = vmatprep.subr.bf16.mxu0 %v254
    %286 = vmatpush1.bf16.msra.mxu0 %v253
    %287 = vmatprep.subr.bf16.mxu0 0
    %288 = vmatpush1.bf16.msra.mxu0 0
    %289 = vmatprep.subr.bf16.mxu0 0
    %290 = vmatpush1.bf16.msra.mxu0 0
    %291 = vmatprep.subr.bf16.mxu0 0
    %292 = vmatpush1.bf16.msra.mxu0 0
    %293 = vmatprep.subr.bf16.mxu0 0
    %294 = vmatpush1.bf16.msra.mxu0 0
    %295 = vmatprep.subr.bf16.mxu0 0
    %296 = vmatpush1.bf16.msra.mxu0 0
    %297 = vmatprep.subr.bf16.mxu0 0
    %298 = vmatpush1.bf16.msra.mxu0 0
    %299 = vmatprep.subr.bf16.mxu0 0
    %300 = vmatpush1.bf16.msra.mxu0 0
    %301 = vmatprep.subr.bf16.mxu0 0
    %302 = vmatpush1.bf16.msra.mxu0 0
    %303 = vmatprep.mubr.bf16.mxu0 0
    %304 = vmatmul.mubr.bf16.gmra.mrb[0].mxu0 %v174
    %v305 = vpop.f32.mrb[0].mxu0
    %v306 = vadd.f32 0.0, %v305
    %v307 = vpop.f32.mrb[0].mxu0
    %v308 = vadd.f32 0.0, %v307
    %v309 = vpop.f32.mrb[0].mxu0
    %v310 = vadd.f32 0.0, %v309
    %v311 = vpop.f32.mrb[0].mxu0
    %v312 = vadd.f32 0.0, %v311
    %313 = vdwg.mxu0
    %v314 = vld [vmem:[%s4] sm:$0x1]
    %v316 = vlaneseq
    %v317 = vshrl.u32 %v316, 7
    %v318 = vsub.s32 0, %v317
    %v319 = vrot.slane %v314, %v318
    %v321 = vadd.f32 %v306, %v319
    %v322 = vadd.f32 %v310, %v319
    %vm323 = vcmp.ge.f32.partialorder %v321, 0.0
    %vm324 = vcmp.ge.f32.partialorder %v322, 0.0
    %v325 = vmul.f32 %v321, 0.01
    %v326 = vmul.f32 %v322, 0.01
    %v327 = vsel %vm323, %v321, %v325
    %v328 = vsel %vm324, %v322, %v326
    %v329 = vadd.f32 %v327, %v308
    %v330 = vadd.f32 %v328, %v312
    %v331 = vpack.c.bf16 %v330, %v329
    %v332 = vld [vmem:[#allocation8] sm:$0xf]
    %v333 = vld [vmem:[#allocation8 + $0x4] sm:$0xf]
    %v334 = vld [vmem:[#allocation8 + $0x8] sm:$0xf]
    %v335 = vld [vmem:[#allocation8 + $0xc] sm:$0xf]
    %v336 = vld [vmem:[#allocation8 + $0x10] sm:$0xf]
    %v337 = vld [vmem:[#allocation8 + $0x14] sm:$0xf]
    %v338 = vld [vmem:[#allocation8 + $0x18] sm:$0xf]
    %v339 = vld [vmem:[#allocation8 + $0x1c] sm:$0xf]
    %v340 = vld [vmem:[#allocation8 + $0x20] sm:$0xf]
    %v341 = vld [vmem:[#allocation8 + $0x24] sm:$0xf]
    %v342 = vld [vmem:[#allocation8 + $0x28] sm:$0xf]
    %v343 = vld [vmem:[#allocation8 + $0x2c] sm:$0xf]
    %v344 = vld [vmem:[#allocation8 + $0x30] sm:$0xf]
    %v345 = vld [vmem:[#allocation8 + $0x34] sm:$0xf]
    %v346 = vld [vmem:[#allocation8 + $0x38] sm:$0xf]
    %v347 = vld [vmem:[#allocation8 + $0x3c] sm:$0xf]
    %v348 = vld [vmem:[%s6] sm:$0x1]
    %v350 = vlaneseq
    %v351 = vshrl.u32 %v350, 7
    %v352 = vsub.s32 0, %v351
    %v353 = vrot.slane %v348, %v352
    %v371 = vunpack.c.l.b16 %v332
    %v372 = vunpack.c.l.b16 %v333
    %v373 = vunpack.c.l.b16 %v334
    %v374 = vunpack.c.l.b16 %v335
    %v375 = vunpack.c.l.b16 %v336
    %v376 = vunpack.c.l.b16 %v337
    %v377 = vunpack.c.l.b16 %v338
    %v378 = vunpack.c.l.b16 %v339
    %v379 = vunpack.c.l.b16 %v340
    %v380 = vunpack.c.l.b16 %v341
    %v381 = vunpack.c.l.b16 %v342
    %v382 = vunpack.c.l.b16 %v343
    %v383 = vunpack.c.l.b16 %v344
    %v384 = vunpack.c.l.b16 %v345
    %v385 = vunpack.c.l.b16 %v346
    %v386 = vunpack.c.l.b16 %v347
    %v387 = vpack.c.b16 %v372, %v371
    %v388 = vpack.c.b16 %v374, %v373
    %v389 = vpack.c.b16 %v376, %v375
    %v390 = vpack.c.b16 %v378, %v377
    %v391 = vpack.c.b16 %v380, %v379
    %v392 = vpack.c.b16 %v382, %v381
    %v393 = vpack.c.b16 %v384, %v383
    %v394 = vpack.c.b16 %v386, %v385
    %403 = vmatprep.subr.bf16.mxu0 0
    %404 = vmatpush1.bf16.msra.mxu0 %v387
    %405 = vmatprep.subr.bf16.mxu0 0
    %406 = vmatpush1.bf16.msra.mxu0 %v388
    %407 = vmatprep.subr.bf16.mxu0 0
    %408 = vmatpush1.bf16.msra.mxu0 %v389
    %409 = vmatprep.subr.bf16.mxu0 0
    %410 = vmatpush1.bf16.msra.mxu0 %v390
    %411 = vmatprep.subr.bf16.mxu0 0
    %412 = vmatpush1.bf16.msra.mxu0 %v391
    %413 = vmatprep.subr.bf16.mxu0 0
    %414 = vmatpush1.bf16.msra.mxu0 %v392
    %415 = vmatprep.subr.bf16.mxu0 0
    %416 = vmatpush1.bf16.msra.mxu0 %v393
    %417 = vmatprep.subr.bf16.mxu0 0
    %418 = vmatpush1.bf16.msra.mxu0 %v394
    %419 = vmatprep.subr.bf16.mxu0 0
    %420 = vmatpush1.bf16.msra.mxu0 0
    %421 = vmatprep.subr.bf16.mxu0 0
    %422 = vmatpush1.bf16.msra.mxu0 0
    %423 = vmatprep.subr.bf16.mxu0 0
    %424 = vmatpush1.bf16.msra.mxu0 0
    %425 = vmatprep.subr.bf16.mxu0 0
    %426 = vmatpush1.bf16.msra.mxu0 0
    %427 = vmatprep.subr.bf16.mxu0 0
    %428 = vmatpush1.bf16.msra.mxu0 0
    %429 = vmatprep.subr.bf16.mxu0 0
    %430 = vmatpush1.bf16.msra.mxu0 0
    %431 = vmatprep.subr.bf16.mxu0 0
    %432 = vmatpush1.bf16.msra.mxu0 0
    %433 = vmatprep.subr.bf16.mxu0 0
    %434 = vmatpush1.bf16.msra.mxu0 0
    %435 = vmatprep.mubr.bf16.mxu0 0
    %436 = vmatmul.mubr.bf16.gmra.mrb[0].mxu0 %v331
    %v437 = vpop.f32.mrb[0].mxu0
    %v438 = vadd.f32 %v353, %v437
    %v439 = vpop.f32.mrb[0].mxu0
    %v440 = vpop.f32.mrb[0].mxu0
    %v441 = vadd.f32 %v353, %v440
    %v442 = vpop.f32.mrb[0].mxu0
    %443 = vdwg.mxu0
    %v444 = vpack.c.bf16 %v441, %v438
    %v446 = vunpack.c.l.b16 %v444
    %v447 = vunpack.c.h.b16 %v444
    %v448 = vpack.c.b16 %v446, %v446
    %v449 = vpack.c.b16 %v447, %v447
    %452 = vst [vmem:[#allocation10] sm:$0xf] %v448
    %453 = vst [vmem:[#allocation10 + $0x4] sm:$0xf] %v449
    // Predicated region
    $region46: #{tpu_custom_call.1} parent=1 // pred_check
      _
    $region47: #{tpu_custom_call.1} parent=1 // pred_check_branch
      %455 = sbr.rel (0) target = $region49
    $region48: #{tpu_custom_call.1} parent=1 // pred_region
      %s457 = ssub.s32 128, 128
      %458 = vsyncadd [#allocation4], %s457
      %s459 = sshll.u32 [#allocation10], 4
      %s460 = int_to_ptr.vmem [resolvable:$true] %s459
      %465 = dma.vmem_to_hbm [thread:$0]  %s460, 128, %s7, [#allocation4], 64, 64, 4
    $region49: #{tpu_custom_call.1} parent=1 // pred_fallthru
      _
    // Predicated region
    $region50: #{tpu_custom_call.1} parent=1 // pred_check
      _
    $region51: #{tpu_custom_call.1} parent=1 // pred_check_branch
      %467 = sbr.rel (0) target = $region53
    $region52: #{tpu_custom_call.1} parent=1 // pred_region
      %468 = dma.done [#allocation4], 128
    $region53: #{tpu_custom_call.1} parent=1 // pred_fallthru
      _
    %469 = vsyncpa [#allocation3], 1
    %470 = vsyncpa [#allocation6], 1
    %471 = vsyncpa [#allocation9], 1
    %472 = vsyncpa [#allocation4], 1

</llo_original>
